<compile_context>
chip_gen: v5e
topology: v5e:2x2
jax: 0.10.0
libtpu: 0.0.40
codegen_flags: <defaults>
</compile_context>

<pallas_src>
import functools

import jax
import jax.numpy as jnp
from jax.experimental import pallas as pl
from jax.experimental.pallas import tpu as pltpu


def aggregator_kernel(alpha_ref, msg_ref, curr_ref, out_ref):
    # alpha_ref: (tn, M)   msg_ref: (tn, M, D)   curr_ref: (tn, D)   out_ref: (tn, D)
    # Upcast before the reduction so bf16 mailboxes accumulate in f32
    # (jnp.sum otherwise accumulates in the input dtype). VPU slack makes this free.
    alpha = alpha_ref[...].astype(jnp.float32)
    msg = msg_ref[...].astype(jnp.float32)
    curr = curr_ref[...].astype(jnp.float32)

    # bmm(alpha^T, msg).squeeze(1): weighted sum over the neighbor axis M.
    nei_msg = jnp.sum(alpha[:, :, None] * msg, axis=1)          # (tn, D)
    # SUM update (concrete Grail SUMAggregator subclass).
    out_ref[...] = (curr + nei_msg).astype(out_ref.dtype)


def _round_down_mult(x, m):
    return max(m, (x // m) * m)


def _choose_tn(n8, M, D, itemsize, target_msg_bytes=4 << 20, min_steps=8):
    """Pick the node tile so the (double-buffered) msg tile is a few MiB.

    VMEM footprint accounts for TPU tile padding: last dim -> multiple of 128,
    second-last -> multiple of 8. With a ~4 MiB msg tile, 2 buffers of
    (msg + alpha + curr + out) stay well under the 32 MiB default scoped VMEM
    limit, which is valid on v5e/v6e (128 MiB physical) and v7x (64 MiB).
    """
    d_pad = -(-max(D, 128) // 128) * 128
    m_pad = -(-M // 8) * 8
    per_row_msg = m_pad * d_pad * itemsize
    tn = max(8, target_msg_bytes // per_row_msg)
    tn = min(tn, n8)
    tn = _round_down_mult(int(tn), 8)
    # Keep >= min_steps grid steps when N allows it, so the ("parallel",) node
    # axis can be sharded across v7x's 2 TensorCores and the pipeline has depth.
    if n8 >= min_steps * 8 and n8 // tn < min_steps:
        tn = _round_down_mult(n8 // min_steps, 8)
    return int(tn)


@functools.partial(jax.jit, static_argnames=("tn",))
def aggregator_forward(alpha, msg, curr_emb, *, tn=None):
    """alpha: (N, M, 1), msg: (N, M, D), curr_emb: (N, M, D) -> h: (N, D)."""
    N, M, D = msg.shape
    assert alpha.shape == (N, M, 1)
    assert curr_emb.shape == (N, M, D)

    # Wrapper-side layout trims (pure slicing; no compute is hoisted out of the kernel):
    #   * alpha -> (N, M): avoid trailing-dim-1 lane padding in VMEM.
    #   * curr_emb -> (N, D): the kernel only reads neighbor 0; avoid M-fold HBM over-fetch.
    alpha2d = alpha[:, :, 0]
    curr2d = curr_emb[:, 0, :]

    n8 = -(-N // 8) * 8
    tn_eff = tn if tn is not None else _choose_tn(n8, M, D, jnp.dtype(msg.dtype).itemsize)
    n_pad = -(-N // tn_eff) * tn_eff

    msg_p = msg
    if n_pad != N:
        pad = n_pad - N
        alpha2d = jnp.pad(alpha2d, ((0, pad), (0, 0)))
        curr2d = jnp.pad(curr2d, ((0, pad), (0, 0)))
        msg_p = jnp.pad(msg, ((0, pad), (0, 0), (0, 0)))

    grid = (n_pad // tn_eff,)
    # NOTE: if the production D < 128, the (tn, D) output lowers to masked
    # stores; pad D to 128 (or fold nodes into lanes) there. For D >= 128 no
    # change is needed. Write traffic is a small share here, so left as-is.
    out = pl.pallas_call(
        aggregator_kernel,
        out_shape=jax.ShapeDtypeStruct((n_pad, D), msg.dtype),
        grid_spec=pltpu.PrefetchScalarGridSpec(
            num_scalar_prefetch=0,
            grid=grid,
            in_specs=[
                pl.BlockSpec((tn_eff, M), lambda i: (i, 0)),
                pl.BlockSpec((tn_eff, M, D), lambda i: (i, 0, 0)),
                pl.BlockSpec((tn_eff, D), lambda i: (i, 0)),
            ],
            out_specs=pl.BlockSpec((tn_eff, D), lambda i: (i, 0)),
        ),
        # Tiles are sized to fit the default scoped VMEM limit on every chip
        # (incl. v7x's 64 MiB physical VMEM), so vmem_limit_bytes is not raised.
        compiler_params=pltpu.CompilerParams(
            dimension_semantics=("parallel",)
        ),
    )(alpha2d, msg_p, curr2d)

    return out[:N]


def aggregator_reference(alpha, msg, curr_emb):
    curr = curr_emb[:, 0, :]
    nei = jnp.squeeze(jnp.matmul(jnp.swapaxes(alpha, 1, 2), msg), axis=1)
    return curr + nei


if __name__ == "__main__":
    # Small shapes implied by the forward: N nodes, M mailbox neighbors, D emb_dim.
    # N deliberately not a multiple of 8 to exercise the padded tail path.
    N, M, D = 20, 8, 32
    key = jax.random.PRNGKey(0)
    k1, k2, k3 = jax.random.split(key, 3)

    alpha = jax.random.uniform(k1, (N, M, 1), dtype=jnp.float32)
    msg = jax.random.normal(k2, (N, M, D), dtype=jnp.float32)
    curr_emb = jax.random.normal(k3, (N, M, D), dtype=jnp.float32)

    out = aggregator_forward(alpha, msg, curr_emb)
    out = jax.block_until_ready(out)

    ref = aggregator_reference(alpha, msg, curr_emb)
    assert out.shape == (N, D)
    assert jnp.allclose(out, ref, atol=1e-5, rtol=1e-5)

    print("KERNEL_OK")
</pallas_src>

<mosaic_0001>
module attributes {stable_mosaic.version = 11 : i64} {
  func.func @aggregator_kernel(%arg0: i32, %arg1: memref<24x8xf32, #tpu.memory_space<vmem>>, %arg2: memref<24x8x32xf32, #tpu.memory_space<vmem>>, %arg3: memref<24x32xf32, #tpu.memory_space<vmem>>, %arg4: memref<24x32xf32, #tpu.memory_space<vmem>>) attributes {dimension_semantics = [#tpu.dimension_semantics<parallel>], iteration_bounds = array<i64: 1>, scalar_prefetch = 0 : i64, scratch_operands = 0 : i64, tpu.core_type = #tpu.core_type<tc>, window_params = [{transform_indices = @transform_0, window_bounds = array<i64: 24, 8>}, {transform_indices = @transform_1, window_bounds = array<i64: 24, 8, 32>}, {transform_indices = @transform_2, window_bounds = array<i64: 24, 32>}, {transform_indices = @transform_3, window_bounds = array<i64: 24, 32>}]} {
    %c0 = arith.constant 0 : index
    %c0_0 = arith.constant 0 : index
    %0 = vector.load %arg1[%c0, %c0_0] : memref<24x8xf32, #tpu.memory_space<vmem>>, vector<24x8xf32>
    %c0_1 = arith.constant 0 : index
    %c0_2 = arith.constant 0 : index
    %c0_3 = arith.constant 0 : index
    %1 = vector.load %arg2[%c0_1, %c0_2, %c0_3] : memref<24x8x32xf32, #tpu.memory_space<vmem>>, vector<24x8x32xf32>
    %c0_4 = arith.constant 0 : index
    %c0_5 = arith.constant 0 : index
    %2 = vector.load %arg3[%c0_4, %c0_5] : memref<24x32xf32, #tpu.memory_space<vmem>>, vector<24x32xf32>
    %3 = vector.shape_cast %0 : vector<24x8xf32> to vector<24x8x1xf32>
    %4 = vector.broadcast %3 : vector<24x8x1xf32> to vector<24x8x32xf32>
    %5 = arith.mulf %4, %1 : vector<24x8x32xf32>
    %cst = arith.constant dense<0.000000e+00> : vector<24x32xf32>
    %6 = vector.multi_reduction <add>, %5, %cst [1] : vector<24x8x32xf32> to vector<24x32xf32>
    %7 = arith.addf %2, %6 : vector<24x32xf32>
    %c0_6 = arith.constant 0 : index
    %c0_7 = arith.constant 0 : index
    %8 = vector.load %arg4[%c0_6, %c0_7] : memref<24x32xf32, #tpu.memory_space<vmem>>, vector<24x32xf32>
    tpu.vector_store %arg4[%c0_6, %c0_7], %7 {strides = array<i32>} : memref<24x32xf32, #tpu.memory_space<vmem>>, vector<24x32xf32>,
    return
  }
  func.func @transform_0(%arg0: i32) -> (i32, i32) {
    %c0_i32 = arith.constant 0 : i32
    %c0_i32_0 = arith.constant 0 : i32
    return %arg0, %c0_i32 : i32, i32
  }
  func.func @transform_1(%arg0: i32) -> (i32, i32, i32) {
    %c0_i32 = arith.constant 0 : i32
    %c0_i32_0 = arith.constant 0 : i32
    %c0_i32_1 = arith.constant 0 : i32
    return %arg0, %c0_i32, %c0_i32_0 : i32, i32, i32
  }
  func.func @transform_2(%arg0: i32) -> (i32, i32) {
    %c0_i32 = arith.constant 0 : i32
    %c0_i32_0 = arith.constant 0 : i32
    return %arg0, %c0_i32 : i32, i32
  }
  func.func @transform_3(%arg0: i32) -> (i32, i32) {
    %c0_i32 = arith.constant 0 : i32
    %c0_i32_0 = arith.constant 0 : i32
    return %arg0, %c0_i32 : i32, i32
  }
}

</mosaic_0001>

<llo_original>
// kernel: aggregator_forward.1
$region0: #{aggregator_forward.1}
  #allocation0 [shape = 'u32[]', space=smem, size = 0x4, offset = 0x4, fixed_abs, tag = 'smem constant byte address 0x4 - core index']
  #allocation1 [shape = 'u32[72,128]{1,0:T(1,128)}', space=vmem, size = 0x9000, scoped, tag = 'internal scratch']
  %s0 = inlined_call_operand.vmem [shape: f32[24,8], index: 0, kind: input, shape index: {}]
  %s1 = inlined_call_operand.vmem [shape: f32[24,8,32], index: 1, kind: input, shape index: {}]
  %s2 = inlined_call_operand.vmem [shape: f32[24,32], index: 2, kind: input, shape index: {}]
  %s3 = inlined_call_operand.hbm [shape: f32[24,32], index: 3, kind: output, shape index: {}]
  %s4 = sld [smem:[#allocation0]]
  $region22: #{aggregator_forward.1} parent=0
    _
  %s6 = ssub.s32 1, %s4
  %s7 = scalar_select 0, %s6, %s4
  $region1: #{aggregator_forward.1} parent=0
    #allocation2 [shape = 'u8[12288]{0}', space=vmem, size = 0x3000, scoped, tag = 'output window, operand 0, single buffered']
    #allocation3 [shape = 's32[1]{0}', space=sflag, size = 0x4, scoped, tag = 'scoped memory for aggregator_forward.1']
    %8 = vsyncpa [#allocation3], 0
    // Predicated region
    $region2: #{aggregator_forward.1} parent=1 // pred_check
      _
    $region3: #{aggregator_forward.1} parent=1 // pred_check_branch
      %10 = sbr.rel (0) target = $region5
    $region4: #{aggregator_forward.1} parent=1 // pred_region
      _
    $region5: #{aggregator_forward.1} parent=1 // pred_fallthru
      _
    // Predicated region
    $region6: #{aggregator_forward.1} parent=1 // pred_check
      _
    $region7: #{aggregator_forward.1} parent=1 // pred_check_branch
      %12 = sbr.rel (0) target = $region9
    $region8: #{aggregator_forward.1} parent=1 // pred_region
      _
    $region9: #{aggregator_forward.1} parent=1 // pred_fallthru
      _
    // Predicated region
    $region10: #{aggregator_forward.1} parent=1 // pred_check
      _
    $region11: #{aggregator_forward.1} parent=1 // pred_check_branch
      %14 = sbr.rel (0) target = $region13
    $region12: #{aggregator_forward.1} parent=1 // pred_region
      _
    $region13: #{aggregator_forward.1} parent=1 // pred_fallthru
      _
    %v15 = vld [vmem:[%s0] sm:$0xff]
    %v16 = vld [vmem:[%s0 + $0x8] sm:$0xff]
    %v17 = vld [vmem:[%s0 + $0x10] sm:$0xff]
    %v18 = vld [vmem:[%s1] sm:$0xff]
    %v19 = vld [vmem:[%s1 + $0x8] sm:$0xff]
    %v20 = vld [vmem:[%s1 + $0x10] sm:$0xff]
    %v21 = vld [vmem:[%s1 + $0x18] sm:$0xff]
    %v22 = vld [vmem:[%s1 + $0x20] sm:$0xff]
    %v23 = vld [vmem:[%s1 + $0x28] sm:$0xff]
    %v24 = vld [vmem:[%s1 + $0x30] sm:$0xff]
    %v25 = vld [vmem:[%s1 + $0x38] sm:$0xff]
    %v26 = vld [vmem:[%s1 + $0x40] sm:$0xff]
    %v27 = vld [vmem:[%s1 + $0x48] sm:$0xff]
    %v28 = vld [vmem:[%s1 + $0x50] sm:$0xff]
    %v29 = vld [vmem:[%s1 + $0x58] sm:$0xff]
    %v30 = vld [vmem:[%s1 + $0x60] sm:$0xff]
    %v31 = vld [vmem:[%s1 + $0x68] sm:$0xff]
    %v32 = vld [vmem:[%s1 + $0x70] sm:$0xff]
    %v33 = vld [vmem:[%s1 + $0x78] sm:$0xff]
    %v34 = vld [vmem:[%s1 + $0x80] sm:$0xff]
    %v35 = vld [vmem:[%s1 + $0x88] sm:$0xff]
    %v36 = vld [vmem:[%s1 + $0x90] sm:$0xff]
    %v37 = vld [vmem:[%s1 + $0x98] sm:$0xff]
    %v38 = vld [vmem:[%s1 + $0xa0] sm:$0xff]
    %v39 = vld [vmem:[%s1 + $0xa8] sm:$0xff]
    %v40 = vld [vmem:[%s1 + $0xb0] sm:$0xff]
    %v41 = vld [vmem:[%s1 + $0xb8] sm:$0xff]
    %v42 = vld [vmem:[%s2] sm:$0xff]
    %v43 = vld [vmem:[%s2 + $0x8] sm:$0xff]
    %v44 = vld [vmem:[%s2 + $0x10] sm:$0xff]
    %v45 = vperm.slane %v15, 0
    %v46 = vlaneseq
    %v47 = vshrl.u32 %v46, 7
    %49 = vset.pattern.permute.xlu0 %v47
    %50 = vperm.xlu0 %49, %v45
    %v51 = vpop.permute.xlu0 %50
    %v52 = vperm.slane %v15, 1
    %v53 = vlaneseq
    %v54 = vshrl.u32 %v53, 7
    %56 = vset.pattern.permute.xlu0 %v54
    %57 = vperm.xlu0 %56, %v52
    %v58 = vpop.permute.xlu0 %57
    %v59 = vperm.slane %v15, 2
    %v60 = vlaneseq
    %v61 = vshrl.u32 %v60, 7
    %63 = vset.pattern.permute.xlu0 %v61
    %64 = vperm.xlu0 %63, %v59
    %v65 = vpop.permute.xlu0 %64
    %v66 = vperm.slane %v15, 3
    %v67 = vlaneseq
    %v68 = vshrl.u32 %v67, 7
    %70 = vset.pattern.permute.xlu0 %v68
    %71 = vperm.xlu0 %70, %v66
    %v72 = vpop.permute.xlu0 %71
    %v73 = vperm.slane %v15, 4
    %v74 = vlaneseq
    %v75 = vshrl.u32 %v74, 7
    %77 = vset.pattern.permute.xlu0 %v75
    %78 = vperm.xlu0 %77, %v73
    %v79 = vpop.permute.xlu0 %78
    %v80 = vperm.slane %v15, 5
    %v81 = vlaneseq
    %v82 = vshrl.u32 %v81, 7
    %84 = vset.pattern.permute.xlu0 %v82
    %85 = vperm.xlu0 %84, %v80
    %v86 = vpop.permute.xlu0 %85
    %v87 = vperm.slane %v15, 6
    %v88 = vlaneseq
    %v89 = vshrl.u32 %v88, 7
    %91 = vset.pattern.permute.xlu0 %v89
    %92 = vperm.xlu0 %91, %v87
    %v93 = vpop.permute.xlu0 %92
    %v94 = vperm.slane %v15, 7
    %v95 = vlaneseq
    %v96 = vshrl.u32 %v95, 7
    %98 = vset.pattern.permute.xlu0 %v96
    %99 = vperm.xlu0 %98, %v94
    %v100 = vpop.permute.xlu0 %99
    %v101 = vperm.slane %v16, 0
    %v102 = vlaneseq
    %v103 = vshrl.u32 %v102, 7
    %105 = vset.pattern.permute.xlu0 %v103
    %106 = vperm.xlu0 %105, %v101
    %v107 = vpop.permute.xlu0 %106
    %v108 = vperm.slane %v16, 1
    %v109 = vlaneseq
    %v110 = vshrl.u32 %v109, 7
    %112 = vset.pattern.permute.xlu0 %v110
    %113 = vperm.xlu0 %112, %v108
    %v114 = vpop.permute.xlu0 %113
    %v115 = vperm.slane %v16, 2
    %v116 = vlaneseq
    %v117 = vshrl.u32 %v116, 7
    %119 = vset.pattern.permute.xlu0 %v117
    %120 = vperm.xlu0 %119, %v115
    %v121 = vpop.permute.xlu0 %120
    %v122 = vperm.slane %v16, 3
    %v123 = vlaneseq
    %v124 = vshrl.u32 %v123, 7
    %126 = vset.pattern.permute.xlu0 %v124
    %127 = vperm.xlu0 %126, %v122
    %v128 = vpop.permute.xlu0 %127
    %v129 = vperm.slane %v16, 4
    %v130 = vlaneseq
    %v131 = vshrl.u32 %v130, 7
    %133 = vset.pattern.permute.xlu0 %v131
    %134 = vperm.xlu0 %133, %v129
    %v135 = vpop.permute.xlu0 %134
    %v136 = vperm.slane %v16, 5
    %v137 = vlaneseq
    %v138 = vshrl.u32 %v137, 7
    %140 = vset.pattern.permute.xlu0 %v138
    %141 = vperm.xlu0 %140, %v136
    %v142 = vpop.permute.xlu0 %141
    %v143 = vperm.slane %v16, 6
    %v144 = vlaneseq
    %v145 = vshrl.u32 %v144, 7
    %147 = vset.pattern.permute.xlu0 %v145
    %148 = vperm.xlu0 %147, %v143
    %v149 = vpop.permute.xlu0 %148
    %v150 = vperm.slane %v16, 7
    %v151 = vlaneseq
    %v152 = vshrl.u32 %v151, 7
    %154 = vset.pattern.permute.xlu0 %v152
    %155 = vperm.xlu0 %154, %v150
    %v156 = vpop.permute.xlu0 %155
    %v157 = vperm.slane %v17, 0
    %v158 = vlaneseq
    %v159 = vshrl.u32 %v158, 7
    %161 = vset.pattern.permute.xlu0 %v159
    %162 = vperm.xlu0 %161, %v157
    %v163 = vpop.permute.xlu0 %162
    %v164 = vperm.slane %v17, 1
    %v165 = vlaneseq
    %v166 = vshrl.u32 %v165, 7
    %168 = vset.pattern.permute.xlu0 %v166
    %169 = vperm.xlu0 %168, %v164
    %v170 = vpop.permute.xlu0 %169
    %v171 = vperm.slane %v17, 2
    %v172 = vlaneseq
    %v173 = vshrl.u32 %v172, 7
    %175 = vset.pattern.permute.xlu0 %v173
    %176 = vperm.xlu0 %175, %v171
    %v177 = vpop.permute.xlu0 %176
    %v178 = vperm.slane %v17, 3
    %v179 = vlaneseq
    %v180 = vshrl.u32 %v179, 7
    %182 = vset.pattern.permute.xlu0 %v180
    %183 = vperm.xlu0 %182, %v178
    %v184 = vpop.permute.xlu0 %183
    %v185 = vperm.slane %v17, 4
    %v186 = vlaneseq
    %v187 = vshrl.u32 %v186, 7
    %189 = vset.pattern.permute.xlu0 %v187
    %190 = vperm.xlu0 %189, %v185
    %v191 = vpop.permute.xlu0 %190
    %v192 = vperm.slane %v17, 5
    %v193 = vlaneseq
    %v194 = vshrl.u32 %v193, 7
    %196 = vset.pattern.permute.xlu0 %v194
    %197 = vperm.xlu0 %196, %v192
    %v198 = vpop.permute.xlu0 %197
    %v199 = vperm.slane %v17, 6
    %v200 = vlaneseq
    %v201 = vshrl.u32 %v200, 7
    %203 = vset.pattern.permute.xlu0 %v201
    %204 = vperm.xlu0 %203, %v199
    %v205 = vpop.permute.xlu0 %204
    %v206 = vperm.slane %v17, 7
    %v207 = vlaneseq
    %v208 = vshrl.u32 %v207, 7
    %210 = vset.pattern.permute.xlu0 %v208
    %211 = vperm.xlu0 %210, %v206
    %v212 = vpop.permute.xlu0 %211
    %v213 = vmul.f32 %v51, %v18
    %v214 = vmul.f32 %v58, %v19
    %v215 = vmul.f32 %v65, %v20
    %v216 = vmul.f32 %v72, %v21
    %v217 = vmul.f32 %v79, %v22
    %v218 = vmul.f32 %v86, %v23
    %v219 = vmul.f32 %v93, %v24
    %v220 = vmul.f32 %v100, %v25
    %v221 = vmul.f32 %v107, %v26
    %v222 = vmul.f32 %v114, %v27
    %v223 = vmul.f32 %v121, %v28
    %v224 = vmul.f32 %v128, %v29
    %v225 = vmul.f32 %v135, %v30
    %v226 = vmul.f32 %v142, %v31
    %v227 = vmul.f32 %v149, %v32
    %v228 = vmul.f32 %v156, %v33
    %v229 = vmul.f32 %v163, %v34
    %v230 = vmul.f32 %v170, %v35
    %v231 = vmul.f32 %v177, %v36
    %v232 = vmul.f32 %v184, %v37
    %v233 = vmul.f32 %v191, %v38
    %v234 = vmul.f32 %v198, %v39
    %v235 = vmul.f32 %v205, %v40
    %v236 = vmul.f32 %v212, %v41
    %vm237 = vcmask 261120
    %v238 = vsel %vm237, %v213, 0.0
    %v239 = vrot.slane %v238, 4
    %v240 = vadd.f32 %v238, %v239
    %v241 = vrot.slane %v240, 2
    %v242 = vadd.f32 %v240, %v241
    %v243 = vrot.slane %v242, 1
    %v244 = vadd.f32 %v242, %v243
    %v245 = vsel %vm237, %v214, 0.0
    %v246 = vrot.slane %v245, 4
    %v247 = vadd.f32 %v245, %v246
    %v248 = vrot.slane %v247, 2
    %v249 = vadd.f32 %v247, %v248
    %v250 = vrot.slane %v249, 1
    %v251 = vadd.f32 %v249, %v250
    %v252 = vsel %vm237, %v215, 0.0
    %v253 = vrot.slane %v252, 4
    %v254 = vadd.f32 %v252, %v253
    %v255 = vrot.slane %v254, 2
    %v256 = vadd.f32 %v254, %v255
    %v257 = vrot.slane %v256, 1
    %v258 = vadd.f32 %v256, %v257
    %v259 = vsel %vm237, %v216, 0.0
    %v260 = vrot.slane %v259, 4
    %v261 = vadd.f32 %v259, %v260
    %v262 = vrot.slane %v261, 2
    %v263 = vadd.f32 %v261, %v262
    %v264 = vrot.slane %v263, 1
    %v265 = vadd.f32 %v263, %v264
    %v266 = vsel %vm237, %v217, 0.0
    %v267 = vrot.slane %v266, 4
    %v268 = vadd.f32 %v266, %v267
    %v269 = vrot.slane %v268, 2
    %v270 = vadd.f32 %v268, %v269
    %v271 = vrot.slane %v270, 1
    %v272 = vadd.f32 %v270, %v271
    %v273 = vsel %vm237, %v218, 0.0
    %v274 = vrot.slane %v273, 4
    %v275 = vadd.f32 %v273, %v274
    %v276 = vrot.slane %v275, 2
    %v277 = vadd.f32 %v275, %v276
    %v278 = vrot.slane %v277, 1
    %v279 = vadd.f32 %v277, %v278
    %v280 = vsel %vm237, %v219, 0.0
    %v281 = vrot.slane %v280, 4
    %v282 = vadd.f32 %v280, %v281
    %v283 = vrot.slane %v282, 2
    %v284 = vadd.f32 %v282, %v283
    %v285 = vrot.slane %v284, 1
    %v286 = vadd.f32 %v284, %v285
    %v287 = vsel %vm237, %v220, 0.0
    %v288 = vrot.slane %v287, 4
    %v289 = vadd.f32 %v287, %v288
    %v290 = vrot.slane %v289, 2
    %v291 = vadd.f32 %v289, %v290
    %v292 = vrot.slane %v291, 1
    %v293 = vadd.f32 %v291, %v292
    %v294 = vsel %vm237, %v221, 0.0
    %v295 = vrot.slane %v294, 4
    %v296 = vadd.f32 %v294, %v295
    %v297 = vrot.slane %v296, 2
    %v298 = vadd.f32 %v296, %v297
    %v299 = vrot.slane %v298, 1
    %v300 = vadd.f32 %v298, %v299
    %v301 = vsel %vm237, %v222, 0.0
    %v302 = vrot.slane %v301, 4
    %v303 = vadd.f32 %v301, %v302
    %v304 = vrot.slane %v303, 2
    %v305 = vadd.f32 %v303, %v304
    %v306 = vrot.slane %v305, 1
    %v307 = vadd.f32 %v305, %v306
    %v308 = vsel %vm237, %v223, 0.0
    %v309 = vrot.slane %v308, 4
    %v310 = vadd.f32 %v308, %v309
    %v311 = vrot.slane %v310, 2
    %v312 = vadd.f32 %v310, %v311
    %v313 = vrot.slane %v312, 1
    %v314 = vadd.f32 %v312, %v313
    %v315 = vsel %vm237, %v224, 0.0
    %v316 = vrot.slane %v315, 4
    %v317 = vadd.f32 %v315, %v316
    %v318 = vrot.slane %v317, 2
    %v319 = vadd.f32 %v317, %v318
    %v320 = vrot.slane %v319, 1
    %v321 = vadd.f32 %v319, %v320
    %v322 = vsel %vm237, %v225, 0.0
    %v323 = vrot.slane %v322, 4
    %v324 = vadd.f32 %v322, %v323
    %v325 = vrot.slane %v324, 2
    %v326 = vadd.f32 %v324, %v325
    %v327 = vrot.slane %v326, 1
    %v328 = vadd.f32 %v326, %v327
    %v329 = vsel %vm237, %v226, 0.0
    %v330 = vrot.slane %v329, 4
    %v331 = vadd.f32 %v329, %v330
    %v332 = vrot.slane %v331, 2
    %v333 = vadd.f32 %v331, %v332
    %v334 = vrot.slane %v333, 1
    %v335 = vadd.f32 %v333, %v334
    %v336 = vsel %vm237, %v227, 0.0
    %v337 = vrot.slane %v336, 4
    %v338 = vadd.f32 %v336, %v337
    %v339 = vrot.slane %v338, 2
    %v340 = vadd.f32 %v338, %v339
    %v341 = vrot.slane %v340, 1
    %v342 = vadd.f32 %v340, %v341
    %v343 = vsel %vm237, %v228, 0.0
    %v344 = vrot.slane %v343, 4
    %v345 = vadd.f32 %v343, %v344
    %v346 = vrot.slane %v345, 2
    %v347 = vadd.f32 %v345, %v346
    %v348 = vrot.slane %v347, 1
    %v349 = vadd.f32 %v347, %v348
    %v350 = vsel %vm237, %v229, 0.0
    %v351 = vrot.slane %v350, 4
    %v352 = vadd.f32 %v350, %v351
    %v353 = vrot.slane %v352, 2
    %v354 = vadd.f32 %v352, %v353
    %v355 = vrot.slane %v354, 1
    %v356 = vadd.f32 %v354, %v355
    %v357 = vsel %vm237, %v230, 0.0
    %v358 = vrot.slane %v357, 4
    %v359 = vadd.f32 %v357, %v358
    %v360 = vrot.slane %v359, 2
    %v361 = vadd.f32 %v359, %v360
    %v362 = vrot.slane %v361, 1
    %v363 = vadd.f32 %v361, %v362
    %v364 = vsel %vm237, %v231, 0.0
    %v365 = vrot.slane %v364, 4
    %v366 = vadd.f32 %v364, %v365
    %v367 = vrot.slane %v366, 2
    %v368 = vadd.f32 %v366, %v367
    %v369 = vrot.slane %v368, 1
    %v370 = vadd.f32 %v368, %v369
    %v371 = vsel %vm237, %v232, 0.0
    %v372 = vrot.slane %v371, 4
    %v373 = vadd.f32 %v371, %v372
    %v374 = vrot.slane %v373, 2
    %v375 = vadd.f32 %v373, %v374
    %v376 = vrot.slane %v375, 1
    %v377 = vadd.f32 %v375, %v376
    %v378 = vsel %vm237, %v233, 0.0
    %v379 = vrot.slane %v378, 4
    %v380 = vadd.f32 %v378, %v379
    %v381 = vrot.slane %v380, 2
    %v382 = vadd.f32 %v380, %v381
    %v383 = vrot.slane %v382, 1
    %v384 = vadd.f32 %v382, %v383
    %v385 = vsel %vm237, %v234, 0.0
    %v386 = vrot.slane %v385, 4
    %v387 = vadd.f32 %v385, %v386
    %v388 = vrot.slane %v387, 2
    %v389 = vadd.f32 %v387, %v388
    %v390 = vrot.slane %v389, 1
    %v391 = vadd.f32 %v389, %v390
    %v392 = vsel %vm237, %v235, 0.0
    %v393 = vrot.slane %v392, 4
    %v394 = vadd.f32 %v392, %v393
    %v395 = vrot.slane %v394, 2
    %v396 = vadd.f32 %v394, %v395
    %v397 = vrot.slane %v396, 1
    %v398 = vadd.f32 %v396, %v397
    %v399 = vsel %vm237, %v236, 0.0
    %v400 = vrot.slane %v399, 4
    %v401 = vadd.f32 %v399, %v400
    %v402 = vrot.slane %v401, 2
    %v403 = vadd.f32 %v401, %v402
    %v404 = vrot.slane %v403, 1
    %v405 = vadd.f32 %v403, %v404
    %vm430 = vcmask 1041409
    %v431 = vsel %vm430, %v251, %v244
    %vm432 = vcmask 1042434
    %v433 = vsel %vm432, %v258, %v431
    %vm434 = vcmask 1043459
    %v435 = vsel %vm434, %v265, %v433
    %vm436 = vcmask 1044484
    %v437 = vsel %vm436, %v272, %v435
    %vm438 = vcmask 1045509
    %v439 = vsel %vm438, %v279, %v437
    %vm440 = vcmask 1046534
    %v441 = vsel %vm440, %v286, %v439
    %vm442 = vcmask 1047559
    %v443 = vsel %vm442, %v293, %v441
    %v444 = vsel %vm430, %v307, %v300
    %v445 = vsel %vm432, %v314, %v444
    %v446 = vsel %vm434, %v321, %v445
    %v447 = vsel %vm436, %v328, %v446
    %v448 = vsel %vm438, %v335, %v447
    %v449 = vsel %vm440, %v342, %v448
    %v450 = vsel %vm442, %v349, %v449
    %v451 = vsel %vm430, %v363, %v356
    %v452 = vsel %vm432, %v370, %v451
    %v453 = vsel %vm434, %v377, %v452
    %v454 = vsel %vm436, %v384, %v453
    %v455 = vsel %vm438, %v391, %v454
    %v456 = vsel %vm440, %v398, %v455
    %v457 = vsel %vm442, %v405, %v456
    %v461 = vadd.f32 %v42, %v443
    %v462 = vadd.f32 %v43, %v450
    %v463 = vadd.f32 %v44, %v457
    %464 = vst.msk [vmem:[#allocation2] sm:$0xff] %vm237, %v461
    %465 = vst.msk [vmem:[#allocation2 + $0x8] sm:$0xff] %vm237, %v462
    %466 = vst.msk [vmem:[#allocation2 + $0x10] sm:$0xff] %vm237, %v463
    // Predicated region
    $region14: #{aggregator_forward.1} parent=1 // pred_check
      _
    $region15: #{aggregator_forward.1} parent=1 // pred_check_branch
      %468 = sbr.rel (0) target = $region17
    $region16: #{aggregator_forward.1} parent=1 // pred_region
      %470 = vsyncadd [#allocation3], 0
      %s471 = sshll.u32 [#allocation2], 4
      %s472 = int_to_ptr.vmem [resolvable:$true] %s471
      %s473 = sshll.u32 %s3, 4
      %s474 = int_to_ptr.hbm [resolvable:$true] %s473
      %479 = dma.vmem_to_hbm [thread:$0]  %s472, 384, %s474, [#allocation3], 128, 128, 8
    $region17: #{aggregator_forward.1} parent=1 // pred_fallthru
      _
    // Predicated region
    $region18: #{aggregator_forward.1} parent=1 // pred_check
      _
    $region19: #{aggregator_forward.1} parent=1 // pred_check_branch
      %481 = sbr.rel (0) target = $region21
    $region20: #{aggregator_forward.1} parent=1 // pred_region
      %483 = dma.done [#allocation3], 384
    $region21: #{aggregator_forward.1} parent=1 // pred_fallthru
      _
    %484 = vsyncpa [#allocation3], 1

</llo_original>
